<compile_context>
chip_gen: v7x
topology: tpu7x:2x2x1
jax: 0.10.0
libtpu: 0.0.40
codegen_flags: <defaults>
</compile_context>

<pallas_src>
import functools

import jax
import jax.numpy as jnp
import numpy as np
from jax.experimental import pallas as pl
from jax.experimental.pallas import tpu as pltpu


def _round_up(a, b):
    return (a + b - 1) // b * b


def _cdiv(a, b):
    return (a + b - 1) // b


def _sublane_multiple(dtype):
    # Packed sublane tile: 8 rows for 4-byte, 16 for 2-byte, 32 for 1-byte dtypes.
    return max(8, 32 // jnp.dtype(dtype).itemsize)


# --------------------------------- kernels --------------------------------- #

def conv_stats_kernel(w_ref, p_ref, y_ref, part_ref):
    """Conv tile (one MXU matmul) + per-tile BatchNorm partial sums.

    w_ref:    (OC_pad, K_pad)   resident weights (native dtype)
    p_ref:    (K_pad, TILE_M)   im2col patches tile
    y_ref:    (OC_pad, TILE_M)  un-normalized conv output, fp32
    part_ref: (OC_pad, 2)       [:,0]=sum(y), [:,1]=sum(y*y) over this tile
    """
    y = jnp.dot(w_ref[...], p_ref[...], preferred_element_type=jnp.float32)
    # Padded lane columns carry all-zero patches -> y == 0 there (no bias in the
    # BN path), so they do not perturb the sums; the wrapper divides by the true
    # element count N*OH*OW.
    part_ref[:, 0:1] = jnp.sum(y, axis=1, keepdims=True)
    part_ref[:, 1:2] = jnp.sum(y * y, axis=1, keepdims=True)
    y_ref[...] = y


def conv_bias_act_kernel(w_ref, bias_ref, p_ref, o_ref, *, use_activation,
                         negative_slope):
    """Conv tile + bias (+ LeakyReLU) for the no-BatchNorm path."""
    z = jnp.dot(w_ref[...], p_ref[...], preferred_element_type=jnp.float32)
    z = z + bias_ref[...]
    if use_activation:
        z = jnp.maximum(z, negative_slope * z)      # LeakyReLU(0.1), 2 VPU ops
    o_ref[...] = z.astype(o_ref.dtype)


def bn_act_kernel(y_ref, scale_ref, shift_ref, o_ref, *, use_activation,
                  negative_slope):
    """Normalize (+ LeakyReLU) over the stored conv output; aliasable in place."""
    z = y_ref[...] * scale_ref[...] + shift_ref[...]
    if use_activation:
        z = jnp.maximum(z, negative_slope * z)
    o_ref[...] = z.astype(o_ref.dtype)


# --------------------------------- wrapper ---------------------------------- #

def _im2col(x, kh, kw, stride, padding, oh, ow, k_pad, ohw_pad):
    """NCHW -> (N, K_pad, OHW_pad); K ordered (c, kh, kw) like PyTorch OIHW."""
    n, c, _, _ = x.shape
    if padding:
        x = jnp.pad(x, ((0, 0), (0, 0), (padding, padding), (padding, padding)))
    cols = []
    for i in range(kh):
        for j in range(kw):
            cols.append(x[:, :, i:i + (oh - 1) * stride + 1:stride,
                             j:j + (ow - 1) * stride + 1:stride])   # (N, C, OH, OW)
    p = jnp.stack(cols, axis=2).reshape(n, c * kh * kw, oh * ow)
    return jnp.pad(p, ((0, 0), (0, k_pad - c * kh * kw), (0, ohw_pad - oh * ow)))


def conv_block(x, weight, bias, gamma, beta, *, kernel_size, stride=1, padding=0,
               use_batch_norm=True, use_activation=False,
               eps=1e-5, negative_slope=0.1, tile_m=2048):
    """PyTorch ConvBlock.forward. x is NCHW, weight is (OC, C, KH, KW)."""
    n, c_in, h, w = x.shape
    oc = weight.shape[0]
    kh = kw = kernel_size
    oh = (h + 2 * padding - kh) // stride + 1
    ow = (w + 2 * padding - kw) // stride + 1
    ohw = oh * ow
    k = c_in * kh * kw

    in_dt = x.dtype
    in_bytes = jnp.dtype(in_dt).itemsize
    oc_pad = _round_up(oc, _sublane_multiple(in_dt))
    k_pad = _round_up(k, _sublane_multiple(in_dt))
    # BN math runs on an fp32 intermediate regardless of the I/O dtype.
    ybuf_bytes = 4 if use_batch_norm else in_bytes

    # --- VMEM-aware lane-tile cap: double-buffered patches + output tiles plus
    # --- (conservatively double-buffered) resident weights must stay well inside
    # --- v7x's 64 MiB per-TensorCore VMEM.
    budget = 30 * 1024 * 1024
    per_lane = 2 * (k_pad * in_bytes + oc_pad * ybuf_bytes)
    avail = max(budget - 2 * oc_pad * k_pad * in_bytes, 128 * per_lane)
    tile_cap = max(128, (avail // per_lane) // 128 * 128)
    tile_target = max(128, min(tile_m, tile_cap))

    # --- Balanced m-tiling: pick num_m first, then the tile size, so the last
    # --- tile is never mostly padding.  A single tile uses the exact extent
    # --- (full-extent block) -> no lane padding and no post-kernel slice.
    ohw_128 = _round_up(ohw, 128)
    num_m = _cdiv(ohw_128, tile_target)
    if num_m == 1:
        tile_m_f = ohw
        ohw_pad = ohw
    else:
        tile_m_f = _round_up(_cdiv(ohw_128, num_m), 128)
        ohw_pad = num_m * tile_m_f

    patches = _im2col(x, kh, kw, stride, padding, oh, ow, k_pad, ohw_pad)
    w2d = jnp.pad(weight.reshape(oc, k),
                  ((0, oc_pad - oc), (0, k_pad - k))).astype(in_dt)

    cparams = pltpu.CompilerParams(
        dimension_semantics=("parallel", "parallel"),   # shards over TCs on v7x
        vmem_limit_bytes=44 * 1024 * 1024)

    grid = (n, num_m)
    w_spec = pl.BlockSpec((oc_pad, k_pad), lambda b, i: (0, 0))
    vec_spec = pl.BlockSpec((oc_pad, 1), lambda b, i: (0, 0))
    patch_spec = pl.BlockSpec((None, k_pad, tile_m_f), lambda b, i: (b, 0, i))
    tile_spec = pl.BlockSpec((None, oc_pad, tile_m_f), lambda b, i: (b, 0, i))

    if use_batch_norm:
        # Pass 1: conv -> fp32 activations + per-tile partial sums (no recompute).
        y_buf, part = pl.pallas_call(
            conv_stats_kernel,
            out_shape=(jax.ShapeDtypeStruct((n, oc_pad, ohw_pad), jnp.float32),
                       jax.ShapeDtypeStruct((n, num_m, oc_pad, 2), jnp.float32)),
            grid=grid,
            in_specs=[w_spec, patch_spec],
            out_specs=(tile_spec,
                       pl.BlockSpec((None, None, oc_pad, 2),
                                    lambda b, i: (b, i, 0, 0))),
            compiler_params=cparams,
        )(w2d, patches)

        # Tiny XLA reduction -> per-channel scale/shift (training-mode batch
        # statistics, matching BatchNorm2d.forward in train mode; the running
        # mean/var buffers are not updated).
        m_valid = float(n * ohw)
        sums = jnp.sum(part[..., 0], axis=(0, 1))
        sumsq = jnp.sum(part[..., 1], axis=(0, 1))
        mean = sums / m_valid
        # TODO(synk): E[y^2]-mean^2 in fp32 can lose precision when |mean| >> std;
        # switch to shifted/Welford-style accumulation if that regime matters.
        var = jnp.maximum(sumsq / m_valid - mean * mean, 0.0)
        gamma_p = jnp.pad(gamma.astype(jnp.float32), (0, oc_pad - oc))
        beta_p = jnp.pad(beta.astype(jnp.float32), (0, oc_pad - oc))
        scale = gamma_p * jax.lax.rsqrt(var + eps)
        shift = beta_p - mean * scale

        # Pass 2: normalize + LeakyReLU; in place over y_buf when dtypes allow.
        alias = {0: 0} if jnp.dtype(in_dt) == jnp.dtype(jnp.float32) else {}
        out = pl.pallas_call(
            functools.partial(bn_act_kernel, use_activation=use_activation,
                              negative_slope=negative_slope),
            out_shape=jax.ShapeDtypeStruct((n, oc_pad, ohw_pad), in_dt),
            grid=grid,
            in_specs=[tile_spec, vec_spec, vec_spec],
            out_specs=tile_spec,
            input_output_aliases=alias,
            compiler_params=cparams,
        )(y_buf, scale.reshape(oc_pad, 1), shift.reshape(oc_pad, 1))
    else:
        # Conv bias only when BN is disabled (bias = not use_batch_norm).
        bias_p = jnp.pad(bias.astype(jnp.float32),
                         (0, oc_pad - oc)).reshape(oc_pad, 1)
        out = pl.pallas_call(
            functools.partial(conv_bias_act_kernel, use_activation=use_activation,
                              negative_slope=negative_slope),
            out_shape=jax.ShapeDtypeStruct((n, oc_pad, ohw_pad), in_dt),
            grid=grid,
            in_specs=[w_spec, vec_spec, patch_spec],
            out_specs=tile_spec,
            compiler_params=cparams,
        )(w2d, bias_p, patches)

    # Already channel-major NCHW; strip padding only if any was added.
    if oc_pad != oc or ohw_pad != ohw:
        out = out[:, :oc, :ohw]
    return out.reshape(n, oc, oh, ow)


def _reference(x, weight, bias, gamma, beta, *, use_batch_norm, use_activation,
               eps=1e-5, negative_slope=0.1):
    """Pure-JAX reference for verification."""
    y = jax.lax.conv_general_dilated(
        x, weight, window_strides=(1, 1), padding="VALID",
        dimension_numbers=("NCHW", "OIHW", "NCHW"))
    if use_batch_norm:
        mean = jnp.mean(y, axis=(0, 2, 3), keepdims=True)
        var = jnp.mean((y - mean) ** 2, axis=(0, 2, 3), keepdims=True)
        y = (y - mean) * jax.lax.rsqrt(var + eps)
        y = y * gamma.reshape(1, -1, 1, 1) + beta.reshape(1, -1, 1, 1)
    else:
        y = y + bias.reshape(1, -1, 1, 1)
    if use_activation:
        y = jnp.where(y >= 0, y, negative_slope * y)
    return y


if __name__ == "__main__":
    # Small shapes consistent with the module: ConvBlock(4, 8, kernel_size=3).
    N, C_IN, H, W = 2, 4, 16, 16
    C_OUT, KSIZE = 8, 3

    key = jax.random.PRNGKey(0)
    kx, kw_, kb = jax.random.split(key, 3)

    x = jax.random.normal(kx, (N, C_IN, H, W), dtype=jnp.float32)
    fan_in = C_IN * KSIZE * KSIZE
    bound = 1.0 / np.sqrt(fan_in)
    weight = jax.random.uniform(kw_, (C_OUT, C_IN, KSIZE, KSIZE),
                                minval=-bound, maxval=bound, dtype=jnp.float32)
    bias = jax.random.uniform(kb, (C_OUT,), minval=-bound, maxval=bound,
                              dtype=jnp.float32)
    gamma = jnp.ones((C_OUT,), jnp.float32)     # BatchNorm2d init: weight=1
    beta = jnp.zeros((C_OUT,), jnp.float32)     # BatchNorm2d init: bias=0

    for use_bn, use_act in [(True, True), (True, False), (False, True)]:
        fwd = jax.jit(functools.partial(conv_block, kernel_size=KSIZE,
                                        use_batch_norm=use_bn,
                                        use_activation=use_act))
        out = jax.block_until_ready(fwd(x, weight, bias, gamma, beta))
        ref = _reference(x, weight, bias, gamma, beta,
                         use_batch_norm=use_bn, use_activation=use_act)
        np.testing.assert_allclose(np.asarray(out), np.asarray(ref),
                                   rtol=2e-3, atol=2e-3)
        assert out.shape == (N, C_OUT, H - KSIZE + 1, W - KSIZE + 1)

    print("KERNEL_OK")
</pallas_src>

<mosaic_0001>
module attributes {stable_mosaic.version = 11 : i64} {
  func.func @bn_act_kernel(%arg0: i32, %arg1: i32, %arg2: memref<1x8x196xf32, #tpu.memory_space<vmem>>, %arg3: memref<8x1xf32, #tpu.memory_space<vmem>>, %arg4: memref<8x1xf32, #tpu.memory_space<vmem>>, %arg5: memref<1x8x196xf32, #tpu.memory_space<vmem>>) attributes {dimension_semantics = [#tpu.dimension_semantics<parallel>, #tpu.dimension_semantics<parallel>], iteration_bounds = array<i64: 2, 1>, scalar_prefetch = 0 : i64, scratch_operands = 0 : i64, tpu.core_type = #tpu.core_type<tc>, window_params = [{transform_indices = @transform_0, window_bounds = array<i64: 1, 8, 196>}, {pipeline_mode = #tpu.pipeline_mode<synchronous>, transform_indices = @transform_1, window_bounds = array<i64: 8, 1>}, {pipeline_mode = #tpu.pipeline_mode<synchronous>, transform_indices = @transform_2, window_bounds = array<i64: 8, 1>}, {transform_indices = @transform_3, window_bounds = array<i64: 1, 8, 196>}]} {
    %c0 = arith.constant 0 : index
    %c0_0 = arith.constant 0 : index
    %c0_1 = arith.constant 0 : index
    %0 = vector.load %arg2[%c0, %c0_0, %c0_1] : memref<1x8x196xf32, #tpu.memory_space<vmem>>, vector<1x8x196xf32>
    %1 = vector.shape_cast %0 : vector<1x8x196xf32> to vector<8x196xf32>
    %c0_2 = arith.constant 0 : index
    %c0_3 = arith.constant 0 : index
    %2 = vector.load %arg3[%c0_2, %c0_3] : memref<8x1xf32, #tpu.memory_space<vmem>>, vector<8x1xf32>
    %3 = vector.broadcast %2 : vector<8x1xf32> to vector<8x196xf32>
    %4 = arith.mulf %1, %3 : vector<8x196xf32>
    %c0_4 = arith.constant 0 : index
    %c0_5 = arith.constant 0 : index
    %5 = vector.load %arg4[%c0_4, %c0_5] : memref<8x1xf32, #tpu.memory_space<vmem>>, vector<8x1xf32>
    %6 = vector.broadcast %5 : vector<8x1xf32> to vector<8x196xf32>
    %7 = arith.addf %4, %6 : vector<8x196xf32>
    %cst = arith.constant 1.000000e-01 : f32
    %8 = vector.broadcast %cst : f32 to vector<8x196xf32>
    %9 = arith.mulf %8, %7 : vector<8x196xf32>
    %10 = arith.maximumf %7, %9 : vector<8x196xf32>
    %c0_6 = arith.constant 0 : index
    %c0_7 = arith.constant 0 : index
    %c0_8 = arith.constant 0 : index
    %11 = vector.load %arg5[%c0_6, %c0_7, %c0_8] : memref<1x8x196xf32, #tpu.memory_space<vmem>>, vector<1x8x196xf32>
    %12 = vector.shape_cast %11 : vector<1x8x196xf32> to vector<8x196xf32>
    %13 = vector.shape_cast %10 : vector<8x196xf32> to vector<1x8x196xf32>
    tpu.vector_store %arg5[%c0_6, %c0_7, %c0_8], %13 {strides = array<i32>} : memref<1x8x196xf32, #tpu.memory_space<vmem>>, vector<1x8x196xf32>,
    return
  }
  func.func @transform_0(%arg0: i32, %arg1: i32) -> (i32, i32, i32) {
    %c0_i32 = arith.constant 0 : i32
    %c0_i32_0 = arith.constant 0 : i32
    return %arg0, %c0_i32, %arg1 : i32, i32, i32
  }
  func.func @transform_1(%arg0: i32, %arg1: i32) -> (i32, i32) {
    %c0_i32 = arith.constant 0 : i32
    %c0_i32_0 = arith.constant 0 : i32
    %c0_i32_1 = arith.constant 0 : i32
    return %c0_i32, %c0_i32_0 : i32, i32
  }
  func.func @transform_2(%arg0: i32, %arg1: i32) -> (i32, i32) {
    %c0_i32 = arith.constant 0 : i32
    %c0_i32_0 = arith.constant 0 : i32
    %c0_i32_1 = arith.constant 0 : i32
    return %c0_i32, %c0_i32_0 : i32, i32
  }
  func.func @transform_3(%arg0: i32, %arg1: i32) -> (i32, i32, i32) {
    %c0_i32 = arith.constant 0 : i32
    %c0_i32_0 = arith.constant 0 : i32
    return %arg0, %c0_i32, %arg1 : i32, i32, i32
  }
}

module attributes {stable_mosaic.version = 11 : i64} {
  func.func @conv_stats_kernel(%arg0: i32, %arg1: i32, %arg2: memref<8x40xf32, #tpu.memory_space<vmem>>, %arg3: memref<1x40x196xf32, #tpu.memory_space<vmem>>, %arg4: memref<1x8x196xf32, #tpu.memory_space<vmem>>, %arg5: memref<1x1x8x2xf32, #tpu.memory_space<vmem>>) attributes {dimension_semantics = [#tpu.dimension_semantics<parallel>, #tpu.dimension_semantics<parallel>], iteration_bounds = array<i64: 2, 1>, scalar_prefetch = 0 : i64, scratch_operands = 0 : i64, tpu.core_type = #tpu.core_type<tc>, window_params = [{pipeline_mode = #tpu.pipeline_mode<synchronous>, transform_indices = @transform_0, window_bounds = array<i64: 8, 40>}, {transform_indices = @transform_1, window_bounds = array<i64: 1, 40, 196>}, {transform_indices = @transform_2, window_bounds = array<i64: 1, 8, 196>}, {transform_indices = @transform_3, window_bounds = array<i64: 1, 1, 8, 2>}]} {
    %c0 = arith.constant 0 : index
    %c0_0 = arith.constant 0 : index
    %0 = vector.load %arg2[%c0, %c0_0] : memref<8x40xf32, #tpu.memory_space<vmem>>, vector<8x40xf32>
    %c0_1 = arith.constant 0 : index
    %c0_2 = arith.constant 0 : index
    %c0_3 = arith.constant 0 : index
    %1 = vector.load %arg3[%c0_1, %c0_2, %c0_3] : memref<1x40x196xf32, #tpu.memory_space<vmem>>, vector<1x40x196xf32>
    %2 = vector.shape_cast %1 : vector<1x40x196xf32> to vector<40x196xf32>
    %cst = arith.constant dense<0.000000e+00> : vector<8x196xf32>
    %3 = tpu.matmul %0, %2, %cst {dimension_numbers = #tpu.dot_dimension_numbers<[1], [0], [0], [1], [0, 0, 1, 1], [], []>} : vector<8x40xf32>, vector<40x196xf32>, vector<8x196xf32> -> vector<8x196xf32>
    %cst_4 = arith.constant dense<0.000000e+00> : vector<8xf32>
    %4 = vector.multi_reduction <add>, %3, %cst_4 [1] : vector<8x196xf32> to vector<8xf32>
    %5 = vector.shape_cast %4 : vector<8xf32> to vector<8x1xf32>
    %c0_5 = arith.constant 0 : index
    %c0_6 = arith.constant 0 : index
    %c0_7 = arith.constant 0 : index
    %c0_8 = arith.constant 0 : index
    %6 = vector.load %arg5[%c0_5, %c0_6, %c0_7, %c0_8] : memref<1x1x8x2xf32, #tpu.memory_space<vmem>>, vector<1x1x8x1xf32>
    %7 = vector.shape_cast %6 : vector<1x1x8x1xf32> to vector<8x1xf32>
    %8 = vector.shape_cast %5 : vector<8x1xf32> to vector<1x1x8x1xf32>
    tpu.vector_store %arg5[%c0_5, %c0_6, %c0_7, %c0_8], %8 {strides = array<i32>} : memref<1x1x8x2xf32, #tpu.memory_space<vmem>>, vector<1x1x8x1xf32>,
    %9 = arith.mulf %3, %3 : vector<8x196xf32>
    %cst_9 = arith.constant dense<0.000000e+00> : vector<8xf32>
    %10 = vector.multi_reduction <add>, %9, %cst_9 [1] : vector<8x196xf32> to vector<8xf32>
    %11 = vector.shape_cast %10 : vector<8xf32> to vector<8x1xf32>
    %c0_10 = arith.constant 0 : index
    %c0_11 = arith.constant 0 : index
    %c0_12 = arith.constant 0 : index
    %c1 = arith.constant 1 : index
    %12 = vector.load %arg5[%c0_10, %c0_11, %c0_12, %c1] : memref<1x1x8x2xf32, #tpu.memory_space<vmem>>, vector<1x1x8x1xf32>
    %13 = vector.shape_cast %12 : vector<1x1x8x1xf32> to vector<8x1xf32>
    %14 = vector.shape_cast %11 : vector<8x1xf32> to vector<1x1x8x1xf32>
    tpu.vector_store %arg5[%c0_10, %c0_11, %c0_12, %c1], %14 {strides = array<i32>} : memref<1x1x8x2xf32, #tpu.memory_space<vmem>>, vector<1x1x8x1xf32>,
    %c0_13 = arith.constant 0 : index
    %c0_14 = arith.constant 0 : index
    %c0_15 = arith.constant 0 : index
    %15 = vector.load %arg4[%c0_13, %c0_14, %c0_15] : memref<1x8x196xf32, #tpu.memory_space<vmem>>, vector<1x8x196xf32>
    %16 = vector.shape_cast %15 : vector<1x8x196xf32> to vector<8x196xf32>
    %17 = vector.shape_cast %3 : vector<8x196xf32> to vector<1x8x196xf32>
    tpu.vector_store %arg4[%c0_13, %c0_14, %c0_15], %17 {strides = array<i32>} : memref<1x8x196xf32, #tpu.memory_space<vmem>>, vector<1x8x196xf32>,
    return
  }
  func.func @transform_0(%arg0: i32, %arg1: i32) -> (i32, i32) {
    %c0_i32 = arith.constant 0 : i32
    %c0_i32_0 = arith.constant 0 : i32
    %c0_i32_1 = arith.constant 0 : i32
    return %c0_i32, %c0_i32_0 : i32, i32
  }
  func.func @transform_1(%arg0: i32, %arg1: i32) -> (i32, i32, i32) {
    %c0_i32 = arith.constant 0 : i32
    %c0_i32_0 = arith.constant 0 : i32
    return %arg0, %c0_i32, %arg1 : i32, i32, i32
  }
  func.func @transform_2(%arg0: i32, %arg1: i32) -> (i32, i32, i32) {
    %c0_i32 = arith.constant 0 : i32
    %c0_i32_0 = arith.constant 0 : i32
    return %arg0, %c0_i32, %arg1 : i32, i32, i32
  }
  func.func @transform_3(%arg0: i32, %arg1: i32) -> (i32, i32, i32, i32) {
    %c0_i32 = arith.constant 0 : i32
    %c0_i32_0 = arith.constant 0 : i32
    %c0_i32_1 = arith.constant 0 : i32
    return %arg0, %arg1, %c0_i32, %c0_i32_0 : i32, i32, i32, i32
  }
}

</mosaic_0001>

<llo_original>
// kernel: conv_block.3
$region0: #{conv_block.3}
  #allocation0 [shape = 'u32[]', space=smem, size = 0x4, offset = 0x4, fixed_abs, tag = 'smem constant byte address 0x4 - core index']
  #allocation1 [shape = 'u32[144,128]{1,0:T(1,128)}', space=vmem, size = 0x12000, scoped, tag = 'internal scratch']
  %s0 = inlined_call_operand.vmem [shape: f32[2,8,196], index: 0, kind: input, shape index: {}, may-alias: {0,3}]
  %s1 = inlined_call_operand.vmem [shape: f32[8,1], index: 1, kind: input, shape index: {}]
  %s2 = inlined_call_operand.vmem [shape: f32[8,1], index: 2, kind: input, shape index: {}]
  %s3 = inlined_call_operand.vmem [shape: f32[2,8,196], index: 3, kind: output, shape index: {}, may-alias: {0,3}]
  %s4 = sld [smem:[#allocation0]]
  $region45: #{conv_block.3} parent=0
    _
  %s6 = ssub.s32 1, %s4
  %s7 = scalar_select 0, %s6, %s4
  loop: start=0, step=1, limit=4
  $region2: #{conv_block.3} parent=0 // loop_pre_header
    _
  $region3: #{conv_block.3} parent=0 // loop_header
    %s9 = sphi 0, %s13
    %p10 = scmp.ge.s32.totalorder %s9, 4
    %s16 = sphi 0, %s28
    %s17 = sphi 0, %s24
    %s18 = sphi 0, %s16
    %s19 = sphi 0, %s17
    %s20 = sphi 0, %s18
    %s21 = sphi 0, %s19
    %s33 = sphi 0, %s35
    %s36 = sphi 0, %s33
    %s37 = sphi 0, %s36
    %s53 = sphi 0, %s37
    %s57 = sphi 0, %s57
    %s59 = sphi 0, %s57
    %s60 = sphi 0, %s59
    %s74 = sphi 0, %s60
    %s78 = sphi 0, %s78
    %s80 = sphi 0, %s78
    %s81 = sphi 0, %s80
    %s95 = sphi 0, %s81
    %s103 = sphi 0, %s105
    %s106 = sphi 0, %s103
    %s107 = sphi 0, %s106
    %s123 = sphi 0, %s107
  $region4: #{conv_block.3} parent=0 // loop_header_branch
    %12 = sbr.rel (%p10) target = $region8
  $region5: #{conv_block.3} parent=0 // loop_body
    %s14 = ssub.s32 %s9, 1
    %s15 = ssub.s32 %s9, 2
    %s22 = sadd.s32 1, %s17
    %p23 = scmp.ge.s32.totalorder %s22, 1
    %s24 = scalar_select %p23, 0, %s22
    %s25 = sadd.s32 1, %s16
    %s26 = scalar_select %p23, %s25, %s16
    %p27 = scmp.ge.s32.totalorder %s26, 2
    %s28 = scalar_select %p27, 0, %s26
    %s29 = ssub.s32 %s16, %s28
    %s30 = ssub.s32 %s17, %s24
    %s31 = sor.u32 %s29, %s30
    %p32 = scmp.eq.s32.totalorder %s31, 0
    %s34 = sadd.s32 %s33, 1
    %s35 = scalar_select %p32, %s33, %s34
    %p38 = pneg %p32
    %p39 = scmp.eq.s32.totalorder %s9, 1
    %p40 = por %p38, %p39
    %p41 = scmp.ne.s32.totalorder %s33, %s36
    %p42 = scmp.eq.s32.totalorder %s9, 0
    %p43 = por %p41, %p42
    %p44 = scmp.ne.s32.totalorder %s33, %s36
    %p45 = scmp.eq.s32.totalorder %s14, 1
    %p46 = por %p44, %p45
    %p47 = scmp.ne.s32.totalorder %s36, %s37
    %p48 = scmp.eq.s32.totalorder %s14, 0
    %p49 = por %p47, %p48
    %p50 = scmp.ne.s32.totalorder %s36, %s37
    %p51 = scmp.eq.s32.totalorder %s15, 1
    %p52 = por %p50, %p51
    %p54 = scmp.ne.s32.totalorder %s37, %s53
    %p55 = scmp.eq.s32.totalorder %s15, 0
    %p56 = por %p54, %p55
    %s58 = sadd.s32 %s57, 1
    %p61 = scmp.eq.s32.totalorder %s9, 1
    %p62 = scmp.ne.s32.totalorder %s57, %s59
    %p63 = scmp.eq.s32.totalorder %s9, 0
    %p64 = por %p62, %p63
    %p65 = scmp.ne.s32.totalorder %s57, %s59
    %p66 = scmp.eq.s32.totalorder %s14, 1
    %p67 = por %p65, %p66
    %p68 = scmp.ne.s32.totalorder %s59, %s60
    %p69 = scmp.eq.s32.totalorder %s14, 0
    %p70 = por %p68, %p69
    %p71 = scmp.ne.s32.totalorder %s59, %s60
    %p72 = scmp.eq.s32.totalorder %s15, 1
    %p73 = por %p71, %p72
    %p75 = scmp.ne.s32.totalorder %s60, %s74
    %p76 = scmp.eq.s32.totalorder %s15, 0
    %p77 = por %p75, %p76
    %s79 = sadd.s32 %s78, 1
    %p82 = scmp.eq.s32.totalorder %s9, 1
    %p83 = scmp.ne.s32.totalorder %s78, %s80
    %p84 = scmp.eq.s32.totalorder %s9, 0
    %p85 = por %p83, %p84
    %p86 = scmp.ne.s32.totalorder %s78, %s80
    %p87 = scmp.eq.s32.totalorder %s14, 1
    %p88 = por %p86, %p87
    %p89 = scmp.ne.s32.totalorder %s80, %s81
    %p90 = scmp.eq.s32.totalorder %s14, 0
    %p91 = por %p89, %p90
    %p92 = scmp.ne.s32.totalorder %s80, %s81
    %p93 = scmp.eq.s32.totalorder %s15, 1
    %p94 = por %p92, %p93
    %p96 = scmp.ne.s32.totalorder %s81, %s95
    %p97 = scmp.eq.s32.totalorder %s15, 0
    %p98 = por %p96, %p97
    %s99 = ssub.s32 %s16, %s28
    %s100 = ssub.s32 %s17, %s24
    %s101 = sor.u32 %s99, %s100
    %p102 = scmp.eq.s32.totalorder %s101, 0
    %s104 = sadd.s32 %s103, 1
    %s105 = scalar_select %p102, %s103, %s104
    %p108 = pneg %p102
    %p109 = scmp.eq.s32.totalorder %s9, 1
    %p110 = por %p108, %p109
    %p111 = scmp.ne.s32.totalorder %s103, %s106
    %p112 = scmp.eq.s32.totalorder %s9, 0
    %p113 = por %p111, %p112
    %p114 = scmp.ne.s32.totalorder %s103, %s106
    %p115 = scmp.eq.s32.totalorder %s14, 1
    %p116 = por %p114, %p115
    %p117 = scmp.ne.s32.totalorder %s106, %s107
    %p118 = scmp.eq.s32.totalorder %s14, 0
    %p119 = por %p117, %p118
    %p120 = scmp.ne.s32.totalorder %s106, %s107
    %p121 = scmp.eq.s32.totalorder %s15, 1
    %p122 = por %p120, %p121
    %p124 = scmp.ne.s32.totalorder %s107, %s123
    %p125 = scmp.eq.s32.totalorder %s15, 0
    %p126 = por %p124, %p125
    %p127 = scmp.le.s32.totalorder 1, %s9
    %p128 = scmp.lt.s32.totalorder %s9, 3
    %p129 = pnand %p127, %p128
    %p130 = pneg %p129
    // Predicated region
    $region9: #{conv_block.3} parent=5 // pred_check
      _
    $region10: #{conv_block.3} parent=5 // pred_check_branch
      %132 = sbr.rel (%p129) target = $region12
    $region11: #{conv_block.3} parent=5 // pred_region
      %s133 = ssub.s32 %s9, 1
      // Predicated region
      $region13: #{conv_block.3} parent=11 // pred_check
        %p134 = pneg %p70
      $region14: #{conv_block.3} parent=11 // pred_check_branch
        %136 = sbr.rel (%p134) target = $region16
      $region15: #{conv_block.3} parent=11 // pred_region
        _
      $region16: #{conv_block.3} parent=11 // pred_fallthru
        _
      // Predicated region
      $region17: #{conv_block.3} parent=11 // pred_check
        %p137 = pneg %p91
      $region18: #{conv_block.3} parent=11 // pred_check_branch
        %139 = sbr.rel (%p137) target = $region20
      $region19: #{conv_block.3} parent=11 // pred_region
        _
      $region20: #{conv_block.3} parent=11 // pred_fallthru
        _
    $region12: #{conv_block.3} parent=5 // pred_fallthru
      _
    %p140 = scmp.lt.s32.totalorder %s9, 2
    // Predicated region
    $region21: #{conv_block.3} parent=5 // pred_check
      %p141 = pneg %p140
    $region22: #{conv_block.3} parent=5 // pred_check_branch
      %143 = sbr.rel (%p141) target = $region24
    $region23: #{conv_block.3} parent=5 // pred_region
      // Predicated region
      $region25: #{conv_block.3} parent=23 // pred_check
        %p144 = pneg %p43
      $region26: #{conv_block.3} parent=23 // pred_check_branch
        %146 = sbr.rel (%p144) target = $region28
      $region27: #{conv_block.3} parent=23 // pred_region
        %s147 = smul.u32 2, %s17
        %p148 = scmp.lt.s32.totalorder %s16, 1
        %s149 = scalar_select %p148, %s16, 1
        %p150 = scmp.lt.s32.totalorder %s147, 1
        %s151 = scalar_select %p150, %s147, 1
        %s152 = smul.addr %s149, 2
        %s153 = sadd.s32 %s151, %s152
        %s154 = smul.addr %s153, 8
        %s155 = scalar_lea.vmem %s0, %s154
        %s156 = smul.u32 2, %s17
      $region28: #{conv_block.3} parent=23 // pred_fallthru
        _
    $region24: #{conv_block.3} parent=5 // pred_fallthru
      _
    %p157 = scmp.le.s32.totalorder 1, %s9
    %p158 = scmp.lt.s32.totalorder %s9, 3
    %p159 = pnand %p157, %p158
    %p160 = pneg %p159
    // Predicated region
    $region29: #{conv_block.3} parent=5 // pred_check
      _
    $region30: #{conv_block.3} parent=5 // pred_check_branch
      %162 = sbr.rel (%p159) target = $region32
    $region31: #{conv_block.3} parent=5 // pred_region
      %s163 = ssub.s32 %s9, 1
      %s164 = smul.u32 2, %s19
      %p165 = scmp.lt.s32.totalorder %s18, 1
      %s166 = scalar_select %p165, %s18, 1
      %p167 = scmp.lt.s32.totalorder %s164, 1
      %s168 = scalar_select %p167, %s164, 1
      %s169 = smul.addr %s166, 2
      %s170 = sadd.s32 %s168, %s169
      %s171 = smul.addr %s170, 8
      %s172 = scalar_lea.vmem %s0, %s171
      %p173 = pneg %p49
      %p174 = pneg %p46
      %p175 = pneg %p70
      %p176 = pneg %p67
      %p177 = pneg %p91
      %p178 = pneg %p88
      %p179 = pneg %p119
      %p180 = pneg %p116
      %s181 = smul.u32 2, %s19
      %p182 = scmp.lt.s32.totalorder %s18, 1
      %s183 = scalar_select %p182, %s18, 1
      %p184 = scmp.lt.s32.totalorder %s181, 1
      %s185 = scalar_select %p184, %s181, 1
      %s186 = smul.addr %s183, 2
      %s187 = sadd.s32 %s185, %s186
      %s188 = smul.addr %s187, 8
      %s189 = scalar_lea.vmem %s3, %s188
      %s190 = smul.u32 2, %s19
      %p191 = scmp.lt.s32.totalorder %s18, 1
      %s192 = scalar_select %p191, %s18, 1
      %p193 = scmp.lt.s32.totalorder %s190, 1
      %s194 = scalar_select %p193, %s190, 1
      %s195 = smul.addr %s192, 2
      %s196 = sadd.s32 %s194, %s195
      %s197 = smul.addr %s196, 8
      %s198 = scalar_lea.vmem %s0, %s197
      %s199 = smul.u32 2, %s19
      %s200 = smul.u32 2, %s19
      %p201 = scmp.lt.s32.totalorder %s18, 1
      %s202 = scalar_select %p201, %s18, 1
      %p203 = scmp.lt.s32.totalorder %s200, 1
      %s204 = scalar_select %p203, %s200, 1
      %s205 = smul.addr %s202, 2
      %s206 = sadd.s32 %s204, %s205
      %s207 = smul.addr %s206, 8
      %s208 = scalar_lea.vmem %s3, %s207
      %s209 = smul.u32 2, %s19
      %v210 = vld [vmem:[%s198] sm:$0xff]
      %v211 = vld [vmem:[%s198 + $0x8] sm:$0xff]
      %v212 = vld [vmem:[%s1] sm:$0xff]
      %214 = vset.pattern.permute.xlu0 0
      %215 = vperm.xlu0 %214, %v212
      %v216 = vpop.permute.xlu0 %215
      %v218 = vmul.f32 %v210, %v216
      %v219 = vmul.f32 %v211, %v216
      %v220 = vld [vmem:[%s2] sm:$0xff]
      %222 = vset.pattern.permute.xlu0 0
      %223 = vperm.xlu0 %222, %v220
      %v224 = vpop.permute.xlu0 %223
      %v226 = vadd.f32 %v218, %v224
      %v227 = vadd.f32 %v219, %v224
      %v228 = vmul.f32 %v226, 0.1
      %v229 = vmul.f32 %v227, 0.1
      %v230 = vmax.f32 %v226, %v228
      %v231 = vmax.f32 %v227, %v229
      %232 = vst [vmem:[%s208] sm:$0xff] %v230
      %vm233 = vcmask 556032
      %234 = vst.msk [vmem:[%s208 + $0x8] sm:$0xff] %vm233, %v231
      %s235 = smul.u32 2, %s19
      %p236 = scmp.lt.s32.totalorder %s18, 1
      %s237 = scalar_select %p236, %s18, 1
      %p238 = scmp.lt.s32.totalorder %s235, 1
      %s239 = scalar_select %p238, %s235, 1
      %s240 = smul.addr %s237, 2
      %s241 = sadd.s32 %s239, %s240
      %s242 = smul.addr %s241, 8
      %s243 = scalar_lea.vmem %s3, %s242
      // Predicated region
      $region33: #{conv_block.3} parent=31 // pred_check
        %p244 = pneg %p116
      $region34: #{conv_block.3} parent=31 // pred_check_branch
        %246 = sbr.rel (%p244) target = $region36
      $region35: #{conv_block.3} parent=31 // pred_region
        %s247 = smul.u32 2, %s19
      $region36: #{conv_block.3} parent=31 // pred_fallthru
        _
    $region32: #{conv_block.3} parent=5 // pred_fallthru
      _
    %p248 = scmp.le.s32.totalorder 2, %s9
    // Predicated region
    $region37: #{conv_block.3} parent=5 // pred_check
      %p249 = pneg %p248
    $region38: #{conv_block.3} parent=5 // pred_check_branch
      %251 = sbr.rel (%p249) target = $region40
    $region39: #{conv_block.3} parent=5 // pred_region
      %s252 = ssub.s32 %s9, 2
      // Predicated region
      $region41: #{conv_block.3} parent=39 // pred_check
        %p253 = pneg %p122
      $region42: #{conv_block.3} parent=39 // pred_check_branch
        %255 = sbr.rel (%p253) target = $region44
      $region43: #{conv_block.3} parent=39 // pred_region
        %s256 = smul.u32 2, %s21
        %p257 = scmp.lt.s32.totalorder %s20, 1
        %s258 = scalar_select %p257, %s20, 1
        %p259 = scmp.lt.s32.totalorder %s256, 1
        %s260 = scalar_select %p259, %s256, 1
        %s261 = smul.addr %s258, 2
        %s262 = sadd.s32 %s260, %s261
        %s263 = smul.addr %s262, 8
        %s264 = scalar_lea.vmem %s3, %s263
      $region44: #{conv_block.3} parent=39 // pred_fallthru
        _
    $region40: #{conv_block.3} parent=5 // pred_fallthru
      _
  $region6: #{conv_block.3} parent=0 // loop_footer
    %s13 = sadd.s32 1, %s9
  $region7: #{conv_block.3} parent=0 // loop_footer_branch
    %8 = sbr.rel target = $region3
  $region8: #{conv_block.3} parent=0 // loop_exit
    _

// kernel: conv_block.2
$region0: #{conv_block.2}
  #allocation0 [shape = 'u32[]', space=smem, size = 0x4, offset = 0x4, fixed_abs, tag = 'smem constant byte address 0x4 - core index']
  #allocation1 [shape = 'u32[144,128]{1,0:T(1,128)}', space=vmem, size = 0x12000, scoped, tag = 'internal scratch']
  %s0 = inlined_call_operand.vmem [shape: f32[8,40], index: 0, kind: input, shape index: {}]
  %s1 = inlined_call_operand.vmem [shape: f32[2,40,196], index: 1, kind: input, shape index: {}]
  %s2 = inlined_call_operand.vmem [shape: f32[2,8,196], index: 2, kind: output, shape index: {0}]
  %s3 = inlined_call_operand.vmem [shape: f32[2,1,8,2], index: 3, kind: output, shape index: {1}]
  %4 = xla_tuple %s2, %s3
  %s5 = sld [smem:[#allocation0]]
  $region49: #{conv_block.2} parent=0
    _
  %s7 = ssub.s32 1, %s5
  %s8 = scalar_select 0, %s7, %s5
  loop: start=0, step=1, limit=4
  $region2: #{conv_block.2} parent=0 // loop_pre_header
    _
  $region3: #{conv_block.2} parent=0 // loop_header
    %s10 = sphi 0, %s14
    %p11 = scmp.ge.s32.totalorder %s10, 4
    %s17 = sphi 0, %s29
    %s18 = sphi 0, %s25
    %s19 = sphi 0, %s17
    %s20 = sphi 0, %s18
    %s21 = sphi 0, %s19
    %s22 = sphi 0, %s20
    %s30 = sphi 0, %s30
    %s32 = sphi 0, %s30
    %s33 = sphi 0, %s32
    %s47 = sphi 0, %s33
    %s55 = sphi 0, %s57
    %s58 = sphi 0, %s55
    %s59 = sphi 0, %s58
    %s75 = sphi 0, %s59
    %s83 = sphi 0, %s85
    %s86 = sphi 0, %s83
    %s87 = sphi 0, %s86
    %s103 = sphi 0, %s87
    %s111 = sphi 0, %s113
    %s114 = sphi 0, %s111
    %s115 = sphi 0, %s114
    %s131 = sphi 0, %s115
  $region4: #{conv_block.2} parent=0 // loop_header_branch
    %13 = sbr.rel (%p11) target = $region8
  $region5: #{conv_block.2} parent=0 // loop_body
    %s15 = ssub.s32 %s10, 1
    %s16 = ssub.s32 %s10, 2
    %s23 = sadd.s32 1, %s18
    %p24 = scmp.ge.s32.totalorder %s23, 1
    %s25 = scalar_select %p24, 0, %s23
    %s26 = sadd.s32 1, %s17
    %s27 = scalar_select %p24, %s26, %s17
    %p28 = scmp.ge.s32.totalorder %s27, 2
    %s29 = scalar_select %p28, 0, %s27
    %s31 = sadd.s32 %s30, 1
    %p34 = scmp.eq.s32.totalorder %s10, 1
    %p35 = scmp.ne.s32.totalorder %s30, %s32
    %p36 = scmp.eq.s32.totalorder %s10, 0
    %p37 = por %p35, %p36
    %p38 = scmp.ne.s32.totalorder %s30, %s32
    %p39 = scmp.eq.s32.totalorder %s15, 1
    %p40 = por %p38, %p39
    %p41 = scmp.ne.s32.totalorder %s32, %s33
    %p42 = scmp.eq.s32.totalorder %s15, 0
    %p43 = por %p41, %p42
    %p44 = scmp.ne.s32.totalorder %s32, %s33
    %p45 = scmp.eq.s32.totalorder %s16, 1
    %p46 = por %p44, %p45
    %p48 = scmp.ne.s32.totalorder %s33, %s47
    %p49 = scmp.eq.s32.totalorder %s16, 0
    %p50 = por %p48, %p49
    %s51 = ssub.s32 %s17, %s29
    %s52 = ssub.s32 %s18, %s25
    %s53 = sor.u32 %s51, %s52
    %p54 = scmp.eq.s32.totalorder %s53, 0
    %s56 = sadd.s32 %s55, 1
    %s57 = scalar_select %p54, %s55, %s56
    %p60 = pneg %p54
    %p61 = scmp.eq.s32.totalorder %s10, 1
    %p62 = por %p60, %p61
    %p63 = scmp.ne.s32.totalorder %s55, %s58
    %p64 = scmp.eq.s32.totalorder %s10, 0
    %p65 = por %p63, %p64
    %p66 = scmp.ne.s32.totalorder %s55, %s58
    %p67 = scmp.eq.s32.totalorder %s15, 1
    %p68 = por %p66, %p67
    %p69 = scmp.ne.s32.totalorder %s58, %s59
    %p70 = scmp.eq.s32.totalorder %s15, 0
    %p71 = por %p69, %p70
    %p72 = scmp.ne.s32.totalorder %s58, %s59
    %p73 = scmp.eq.s32.totalorder %s16, 1
    %p74 = por %p72, %p73
    %p76 = scmp.ne.s32.totalorder %s59, %s75
    %p77 = scmp.eq.s32.totalorder %s16, 0
    %p78 = por %p76, %p77
    %s79 = ssub.s32 %s17, %s29
    %s80 = ssub.s32 %s18, %s25
    %s81 = sor.u32 %s79, %s80
    %p82 = scmp.eq.s32.totalorder %s81, 0
    %s84 = sadd.s32 %s83, 1
    %s85 = scalar_select %p82, %s83, %s84
    %p88 = pneg %p82
    %p89 = scmp.eq.s32.totalorder %s10, 1
    %p90 = por %p88, %p89
    %p91 = scmp.ne.s32.totalorder %s83, %s86
    %p92 = scmp.eq.s32.totalorder %s10, 0
    %p93 = por %p91, %p92
    %p94 = scmp.ne.s32.totalorder %s83, %s86
    %p95 = scmp.eq.s32.totalorder %s15, 1
    %p96 = por %p94, %p95
    %p97 = scmp.ne.s32.totalorder %s86, %s87
    %p98 = scmp.eq.s32.totalorder %s15, 0
    %p99 = por %p97, %p98
    %p100 = scmp.ne.s32.totalorder %s86, %s87
    %p101 = scmp.eq.s32.totalorder %s16, 1
    %p102 = por %p100, %p101
    %p104 = scmp.ne.s32.totalorder %s87, %s103
    %p105 = scmp.eq.s32.totalorder %s16, 0
    %p106 = por %p104, %p105
    %s107 = ssub.s32 %s17, %s29
    %s108 = ssub.s32 %s18, %s25
    %s109 = sor.u32 %s107, %s108
    %p110 = scmp.eq.s32.totalorder %s109, 0
    %s112 = sadd.s32 %s111, 1
    %s113 = scalar_select %p110, %s111, %s112
    %p116 = pneg %p110
    %p117 = scmp.eq.s32.totalorder %s10, 1
    %p118 = por %p116, %p117
    %p119 = scmp.ne.s32.totalorder %s111, %s114
    %p120 = scmp.eq.s32.totalorder %s10, 0
    %p121 = por %p119, %p120
    %p122 = scmp.ne.s32.totalorder %s111, %s114
    %p123 = scmp.eq.s32.totalorder %s15, 1
    %p124 = por %p122, %p123
    %p125 = scmp.ne.s32.totalorder %s114, %s115
    %p126 = scmp.eq.s32.totalorder %s15, 0
    %p127 = por %p125, %p126
    %p128 = scmp.ne.s32.totalorder %s114, %s115
    %p129 = scmp.eq.s32.totalorder %s16, 1
    %p130 = por %p128, %p129
    %p132 = scmp.ne.s32.totalorder %s115, %s131
    %p133 = scmp.eq.s32.totalorder %s16, 0
    %p134 = por %p132, %p133
    %p135 = scmp.le.s32.totalorder 1, %s10
    %p136 = scmp.lt.s32.totalorder %s10, 3
    %p137 = pnand %p135, %p136
    %p138 = pneg %p137
    // Predicated region
    $region9: #{conv_block.2} parent=5 // pred_check
      _
    $region10: #{conv_block.2} parent=5 // pred_check_branch
      %140 = sbr.rel (%p137) target = $region12
    $region11: #{conv_block.2} parent=5 // pred_region
      %s141 = ssub.s32 %s10, 1
      // Predicated region
      $region13: #{conv_block.2} parent=11 // pred_check
        %p142 = pneg %p43
      $region14: #{conv_block.2} parent=11 // pred_check_branch
        %144 = sbr.rel (%p142) target = $region16
      $region15: #{conv_block.2} parent=11 // pred_region
        _
      $region16: #{conv_block.2} parent=11 // pred_fallthru
        _
    $region12: #{conv_block.2} parent=5 // pred_fallthru
      _
    %p145 = scmp.lt.s32.totalorder %s10, 2
    // Predicated region
    $region17: #{conv_block.2} parent=5 // pred_check
      %p146 = pneg %p145
    $region18: #{conv_block.2} parent=5 // pred_check_branch
      %148 = sbr.rel (%p146) target = $region20
    $region19: #{conv_block.2} parent=5 // pred_region
      // Predicated region
      $region21: #{conv_block.2} parent=19 // pred_check
        %p149 = pneg %p65
      $region22: #{conv_block.2} parent=19 // pred_check_branch
        %151 = sbr.rel (%p149) target = $region24
      $region23: #{conv_block.2} parent=19 // pred_region
        %s152 = smul.u32 2, %s18
        %p153 = scmp.lt.s32.totalorder %s17, 1
        %s154 = scalar_select %p153, %s17, 1
        %p155 = scmp.lt.s32.totalorder %s152, 1
        %s156 = scalar_select %p155, %s152, 1
        %s157 = smul.addr %s154, 10
        %s158 = sadd.s32 %s156, %s157
        %s159 = smul.addr %s158, 8
        %s160 = scalar_lea.vmem %s1, %s159
        %s161 = smul.u32 2, %s18
      $region24: #{conv_block.2} parent=19 // pred_fallthru
        _
    $region20: #{conv_block.2} parent=5 // pred_fallthru
      _
    %p162 = scmp.le.s32.totalorder 1, %s10
    %p163 = scmp.lt.s32.totalorder %s10, 3
    %p164 = pnand %p162, %p163
    %p165 = pneg %p164
    // Predicated region
    $region25: #{conv_block.2} parent=5 // pred_check
      _
    $region26: #{conv_block.2} parent=5 // pred_check_branch
      %167 = sbr.rel (%p164) target = $region28
    $region27: #{conv_block.2} parent=5 // pred_region
      %s168 = ssub.s32 %s10, 1
      %p169 = pneg %p43
      %p170 = pneg %p40
      %s171 = smul.u32 2, %s20
      %p172 = scmp.lt.s32.totalorder %s19, 1
      %s173 = scalar_select %p172, %s19, 1
      %p174 = scmp.lt.s32.totalorder %s171, 1
      %s175 = scalar_select %p174, %s171, 1
      %s176 = smul.addr %s173, 10
      %s177 = sadd.s32 %s175, %s176
      %s178 = smul.addr %s177, 8
      %s179 = scalar_lea.vmem %s1, %s178
      %p180 = pneg %p71
      %p181 = pneg %p68
      %p182 = pneg %p99
      %p183 = pneg %p96
      %s184 = smul.u32 2, %s20
      %p185 = scmp.lt.s32.totalorder %s19, 1
      %s186 = scalar_select %p185, %s19, 1
      %p187 = scmp.lt.s32.totalorder %s184, 1
      %s188 = scalar_select %p187, %s184, 1
      %s189 = smul.addr %s186, 2
      %s190 = sadd.s32 %s188, %s189
      %s191 = smul.addr %s190, 8
      %s192 = scalar_lea.vmem %s2, %s191
      %p193 = pneg %p127
      %p194 = pneg %p124
      %p195 = scmp.lt.s32.totalorder %s19, 1
      %s196 = scalar_select %p195, %s19, 1
      %p197 = scmp.lt.s32.totalorder %s20, 0
      %s198 = scalar_select %p197, %s20, 0
      %s199 = sadd.s32 %s198, %s196
      %s200 = smul.addr %s199, 8
      %s201 = scalar_lea.vmem %s3, %s200
      %s202 = smul.u32 2, %s20
      %p203 = scmp.lt.s32.totalorder %s19, 1
      %s204 = scalar_select %p203, %s19, 1
      %p205 = scmp.lt.s32.totalorder %s202, 1
      %s206 = scalar_select %p205, %s202, 1
      %s207 = smul.addr %s204, 10
      %s208 = sadd.s32 %s206, %s207
      %s209 = smul.addr %s208, 8
      %s210 = scalar_lea.vmem %s1, %s209
      %s211 = smul.u32 2, %s20
      %s212 = smul.u32 2, %s20
      %p213 = scmp.lt.s32.totalorder %s19, 1
      %s214 = scalar_select %p213, %s19, 1
      %p215 = scmp.lt.s32.totalorder %s212, 1
      %s216 = scalar_select %p215, %s212, 1
      %s217 = smul.addr %s214, 2
      %s218 = sadd.s32 %s216, %s217
      %s219 = smul.addr %s218, 8
      %s220 = scalar_lea.vmem %s2, %s219
      %s221 = smul.u32 2, %s20
      %p222 = scmp.lt.s32.totalorder %s19, 1
      %s223 = scalar_select %p222, %s19, 1
      %p224 = scmp.lt.s32.totalorder %s20, 0
      %s225 = scalar_select %p224, %s20, 0
      %s226 = sadd.s32 %s225, %s223
      %s227 = smul.addr %s226, 8
      %s228 = scalar_lea.vmem %s3, %s227
      %v229 = vld [vmem:[%s0] sm:$0xff]
      %v230 = vld [vmem:[%s210] sm:$0xff]
      %v231 = vld [vmem:[%s210 + $0x8] sm:$0xff]
      %v232 = vld [vmem:[%s210 + $0x10] sm:$0xff]
      %v233 = vld [vmem:[%s210 + $0x18] sm:$0xff]
      %v234 = vld [vmem:[%s210 + $0x20] sm:$0xff]
      %v235 = vld [vmem:[%s210 + $0x28] sm:$0xff]
      %v236 = vld [vmem:[%s210 + $0x30] sm:$0xff]
      %v237 = vld [vmem:[%s210 + $0x38] sm:$0xff]
      %v238 = vld [vmem:[%s210 + $0x40] sm:$0xff]
      %v239 = vld [vmem:[%s210 + $0x48] sm:$0xff]
      %vm240 = vcmask 326656
      %v242 = vsel %vm240, %v229, 0
      %244 = vmatprep.subr.mxu0 %v231
      %245 = vmatpush1.msra.mxu0 %v230
      %246 = vmatprep.subr.mxu0 %v233
      %247 = vmatpush1.msra.mxu0 %v232
      %248 = vmatprep.subr.mxu0 %v235
      %249 = vmatpush1.msra.mxu0 %v234
      %250 = vmatprep.subr.mxu0 %v237
      %251 = vmatpush1.msra.mxu0 %v236
      %252 = vmatprep.subr.mxu0 %v239
      %253 = vmatpush1.msra.mxu0 %v238
      %254 = vmatprep.subr.mxu0 0.0
      %255 = vmatpush1.msra.mxu0 0.0
      %256 = vmatprep.subr.mxu0 0.0
      %257 = vmatpush1.msra.mxu0 0.0
      %258 = vmatprep.subr.mxu0 0.0
      %259 = vmatpush1.msra.mxu0 0.0
      %260 = vmatprep.subr.mxu0 0.0
      %261 = vmatpush1.msra.mxu0 0.0
      %262 = vmatprep.subr.mxu0 0.0
      %263 = vmatpush1.msra.mxu0 0.0
      %264 = vmatprep.subr.mxu0 0.0
      %265 = vmatpush1.msra.mxu0 0.0
      %266 = vmatprep.subr.mxu0 0.0
      %267 = vmatpush1.msra.mxu0 0.0
      %268 = vmatprep.subr.mxu0 0.0
      %269 = vmatpush1.msra.mxu0 0.0
      %270 = vmatprep.subr.mxu0 0.0
      %271 = vmatpush1.msra.mxu0 0.0
      %272 = vmatprep.subr.mxu0 0.0
      %273 = vmatpush1.msra.mxu0 0.0
      %274 = vmatprep.subr.mxu0 0.0
      %275 = vmatpush1.msra.mxu0 0.0
      %276 = vmatprep.subr.mxu0 0.0
      %277 = vmatpush1.msra.mxu0 0.0
      %278 = vmatprep.subr.mxu0 0.0
      %279 = vmatpush1.msra.mxu0 0.0
      %280 = vmatprep.subr.mxu0 0.0
      %281 = vmatpush1.msra.mxu0 0.0
      %282 = vmatprep.subr.mxu0 0.0
      %283 = vmatpush1.msra.mxu0 0.0
      %284 = vmatprep.subr.mxu0 0.0
      %285 = vmatpush1.msra.mxu0 0.0
      %286 = vmatprep.subr.mxu0 0.0
      %287 = vmatpush1.msra.mxu0 0.0
      %288 = vmatprep.subr.mxu0 0.0
      %289 = vmatpush1.msra.mxu0 0.0
      %290 = vmatprep.subr.mxu0 0.0
      %291 = vmatpush1.msra.mxu0 0.0
      %292 = vmatprep.subr.mxu0 0.0
      %293 = vmatpush1.msra.mxu0 0.0
      %294 = vmatprep.subr.mxu0 0.0
      %295 = vmatpush1.msra.mxu0 0.0
      %296 = vmatprep.subr.mxu0 0.0
      %297 = vmatpush1.msra.mxu0 0.0
      %298 = vmatprep.subr.mxu0 0.0
      %299 = vmatpush1.msra.mxu0 0.0
      %300 = vmatprep.subr.mxu0 0.0
      %301 = vmatpush1.msra.mxu0 0.0
      %302 = vmatprep.subr.mxu0 0.0
      %303 = vmatpush1.msra.mxu0 0.0
      %304 = vmatprep.subr.mxu0 0.0
      %305 = vmatpush1.msra.mxu0 0.0
      %306 = vmatprep.subr.mxu0 0.0
      %307 = vmatpush1.msra.mxu0 0.0
      %308 = vmatprep.mubr.f32.mxu0 0.0
      %309 = vmatmul.mubr.f32.gmra.mrb[0].mxu0 %v242
      %v310 = vpop.f32.mrb[0].mxu0
      %v311 = vadd.f32 0.0, %v310
      %v312 = vpop.f32.mrb[0].mxu0
      %v313 = vadd.f32 0.0, %v312
      %314 = vdwg.mxu0
      %vm315 = vcmask 556032
      %v316 = vsel %vm315, %v313, 0.0
      %v317 = vadd.f32 %v311, %v316
      %318 = vadd.xlane.f32.xlu0 %v317
      %v319 = vpop.xlane.xlu0 %318
      %vm320 = vcmask 7168
      %321 = vst.msk [vmem:[%s228] sm:$0xff] %vm320, %v319
      %v322 = vmul.f32 %v311, %v311
      %v323 = vmul.f32 %v313, %v313
      %v324 = vsel %vm315, %v323, 0.0
      %v325 = vadd.f32 %v322, %v324
      %326 = vadd.xlane.f32.xlu0 %v325
      %v327 = vpop.xlane.xlu0 %326
      %vm328 = vcmask 15368
      %329 = vst.msk [vmem:[%s228] sm:$0xff] %vm328, %v327
      %330 = vst [vmem:[%s220] sm:$0xff] %v311
      %331 = vst.msk [vmem:[%s220 + $0x8] sm:$0xff] %vm315, %v313
      %s332 = smul.u32 2, %s20
      %p333 = scmp.lt.s32.totalorder %s19, 1
      %s334 = scalar_select %p333, %s19, 1
      %p335 = scmp.lt.s32.totalorder %s332, 1
      %s336 = scalar_select %p335, %s332, 1
      %s337 = smul.addr %s334, 2
      %s338 = sadd.s32 %s336, %s337
      %s339 = smul.addr %s338, 8
      %s340 = scalar_lea.vmem %s2, %s339
      %p341 = scmp.lt.s32.totalorder %s19, 1
      %s342 = scalar_select %p341, %s19, 1
      %p343 = scmp.lt.s32.totalorder %s20, 0
      %s344 = scalar_select %p343, %s20, 0
      %s345 = sadd.s32 %s344, %s342
      %s346 = smul.addr %s345, 8
      %s347 = scalar_lea.vmem %s3, %s346
      // Predicated region
      $region29: #{conv_block.2} parent=27 // pred_check
        %p348 = pneg %p96
      $region30: #{conv_block.2} parent=27 // pred_check_branch
        %350 = sbr.rel (%p348) target = $region32
      $region31: #{conv_block.2} parent=27 // pred_region
        %s351 = smul.u32 2, %s20
      $region32: #{conv_block.2} parent=27 // pred_fallthru
        _
      // Predicated region
      $region33: #{conv_block.2} parent=27 // pred_check
        %p352 = pneg %p124
      $region34: #{conv_block.2} parent=27 // pred_check_branch
        %354 = sbr.rel (%p352) target = $region36
      $region35: #{conv_block.2} parent=27 // pred_region
        _
      $region36: #{conv_block.2} parent=27 // pred_fallthru
        _
    $region28: #{conv_block.2} parent=5 // pred_fallthru
      _
    %p355 = scmp.le.s32.totalorder 2, %s10
    // Predicated region
    $region37: #{conv_block.2} parent=5 // pred_check
      %p356 = pneg %p355
    $region38: #{conv_block.2} parent=5 // pred_check_branch
      %358 = sbr.rel (%p356) target = $region40
    $region39: #{conv_block.2} parent=5 // pred_region
      %s359 = ssub.s32 %s10, 2
      // Predicated region
      $region41: #{conv_block.2} parent=39 // pred_check
        %p360 = pneg %p102
      $region42: #{conv_block.2} parent=39 // pred_check_branch
        %362 = sbr.rel (%p360) target = $region44
      $region43: #{conv_block.2} parent=39 // pred_region
        %s363 = smul.u32 2, %s22
        %p364 = scmp.lt.s32.totalorder %s21, 1
        %s365 = scalar_select %p364, %s21, 1
        %p366 = scmp.lt.s32.totalorder %s363, 1
        %s367 = scalar_select %p366, %s363, 1
        %s368 = smul.addr %s365, 2
        %s369 = sadd.s32 %s367, %s368
        %s370 = smul.addr %s369, 8
        %s371 = scalar_lea.vmem %s2, %s370
      $region44: #{conv_block.2} parent=39 // pred_fallthru
        _
      // Predicated region
      $region45: #{conv_block.2} parent=39 // pred_check
        %p372 = pneg %p130
      $region46: #{conv_block.2} parent=39 // pred_check_branch
        %374 = sbr.rel (%p372) target = $region48
      $region47: #{conv_block.2} parent=39 // pred_region
        %p375 = scmp.lt.s32.totalorder %s21, 1
        %s376 = scalar_select %p375, %s21, 1
        %p377 = scmp.lt.s32.totalorder %s22, 0
        %s378 = scalar_select %p377, %s22, 0
        %s379 = sadd.s32 %s378, %s376
        %s380 = smul.addr %s379, 8
        %s381 = scalar_lea.vmem %s3, %s380
      $region48: #{conv_block.2} parent=39 // pred_fallthru
        _
    $region40: #{conv_block.2} parent=5 // pred_fallthru
      _
  $region6: #{conv_block.2} parent=0 // loop_footer
    %s14 = sadd.s32 1, %s10
  $region7: #{conv_block.2} parent=0 // loop_footer_branch
    %9 = sbr.rel target = $region3
  $region8: #{conv_block.2} parent=0 // loop_exit
    _

</llo_original>
